<compile_context>
chip_gen: v5e
topology: v5e:2x2
jax: 0.10.0
libtpu: 0.0.40
codegen_flags: <defaults>
</compile_context>

<pallas_src>
import jax
import jax.numpy as jnp
from jax import lax
from jax.experimental import pallas as pl
from jax.experimental.pallas import tpu as pltpu


def _round_up(x: int, m: int) -> int:
    return ((x + m - 1) // m) * m


def _cdist_kernel(x1sq_ref, x2sq_ref, x1_ref, x2_ref, o_ref, acc_ref):
    # x1sq_ref: (1, tn, 1)   f32 row norms of the x1 tile
    # x2sq_ref: (1, 1, tm)   f32 row norms of the x2 tile
    # x1_ref:   (1, tn, tk)  native dtype
    # x2_ref:   (1, tm, tk)  native dtype
    # o_ref:    (1, tn, tm)
    # acc_ref:  (tn, tm)     f32 accumulator (resident across K steps)
    k = pl.program_id(3)

    @pl.when(k == 0)
    def _():
        acc_ref[...] = jnp.zeros_like(acc_ref)

    # Contract D against D directly (x1 @ x2.T without materializing the
    # transpose); MXU consumes native dtype, accumulates in f32.
    acc_ref[...] += lax.dot_general(
        x1_ref[0],
        x2_ref[0],
        dimension_numbers=(((1,), (1,)), ((), ())),
        preferred_element_type=jnp.float32,
    )

    @pl.when(k == pl.num_programs(3) - 1)
    def _():
        # ||a - b||^2 = ||a||^2 + ||b||^2 - 2 a.b  (clamp guards cancellation)
        d2 = x1sq_ref[0] + x2sq_ref[0] - 2.0 * acc_ref[...]
        d2 = jnp.maximum(d2, 0.0)
        o_ref[0] = jnp.sqrt(d2).astype(o_ref.dtype)


def euclidean_distance_matrix(
    x1: jax.Array,
    x2: jax.Array,
    *,
    tn_max: int = 256,
    tm_max: int = 256,
    tk_max: int = 512,
) -> jax.Array:
    """Pallas equivalent of torch.cdist(x1, x2) with p=2.

    x1: (B, N, D), x2: (B, M, D) -> (B, N, M).
    2-D inputs (N, D)/(M, D) are also accepted and return (N, M).
    """
    squeeze = False
    if x1.ndim == 2 and x2.ndim == 2:
        x1, x2, squeeze = x1[None], x2[None], True
    assert x1.ndim == 3 and x2.ndim == 3, "expected (B, N, D) and (B, M, D)"
    B, N, D = x1.shape
    B2, M, D2 = x2.shape
    assert B == B2 and D == D2, "batch / feature dims must match"

    out_dtype = jnp.result_type(x1.dtype, x2.dtype)

    # Row squared norms, hoisted out of the per-tile path; accumulated in f32
    # (important when inputs are bf16).
    x1_sq = jnp.sum(x1.astype(jnp.float32) ** 2, axis=-1)  # (B, N)
    x2_sq = jnp.sum(x2.astype(jnp.float32) ** 2, axis=-1)  # (B, M)

    # Tile sizes: lane-aligned (tm/tk multiples of 128, tn multiple of 8),
    # clamped so tiny problems don't over-pad. Defaults keep double-buffered
    # operand tiles + accumulator well inside v7x's 64 MiB VMEM per core.
    tn = min(tn_max, _round_up(N, 8))
    tm = min(tm_max, _round_up(M, 128))
    tk = min(tk_max, _round_up(D, 128))
    n_pad = _round_up(N, tn)
    m_pad = _round_up(M, tm)
    d_pad = _round_up(D, tk)

    # Zero-pad only when needed: padded D columns don't change dot products or
    # norms; padded N/M rows produce harmless values sliced away below.
    if (n_pad, d_pad) != (N, D):
        x1p = jnp.pad(x1, ((0, 0), (0, n_pad - N), (0, d_pad - D)))
    else:
        x1p = x1
    if (m_pad, d_pad) != (M, D):
        x2p = jnp.pad(x2, ((0, 0), (0, m_pad - M), (0, d_pad - D)))
    else:
        x2p = x2
    x1_sq_p = (jnp.pad(x1_sq, ((0, 0), (0, n_pad - N))) if n_pad != N else x1_sq)
    x2_sq_p = (jnp.pad(x2_sq, ((0, 0), (0, m_pad - M))) if m_pad != M else x2_sq)
    x1_sq_p = x1_sq_p[:, :, None]  # (B, n_pad, 1)
    x2_sq_p = x2_sq_p[:, None, :]  # (B, 1, m_pad)

    grid = (B, n_pad // tn, m_pad // tm, d_pad // tk)

    itemsize = jnp.dtype(x1.dtype).itemsize
    cost = pl.CostEstimate(
        flops=2 * B * n_pad * m_pad * d_pad + 5 * B * n_pad * m_pad,
        transcendentals=B * n_pad * m_pad,
        bytes_accessed=(
            B * n_pad * d_pad * itemsize * (m_pad // tm)   # x1 re-reads per M tile
            + B * m_pad * d_pad * itemsize * (n_pad // tn)  # x2 re-reads per N tile
            + B * n_pad * m_pad * jnp.dtype(out_dtype).itemsize
        ),
    )

    out = pl.pallas_call(
        _cdist_kernel,
        out_shape=jax.ShapeDtypeStruct((B, n_pad, m_pad), out_dtype),
        grid_spec=pltpu.PrefetchScalarGridSpec(
            num_scalar_prefetch=0,
            grid=grid,
            in_specs=[
                pl.BlockSpec((1, tn, 1), lambda b, i, j, k: (b, i, 0)),
                pl.BlockSpec((1, 1, tm), lambda b, i, j, k: (b, 0, j)),
                pl.BlockSpec((1, tn, tk), lambda b, i, j, k: (b, i, k)),
                pl.BlockSpec((1, tm, tk), lambda b, i, j, k: (b, j, k)),
            ],
            out_specs=pl.BlockSpec((1, tn, tm), lambda b, i, j, k: (b, i, j)),
            scratch_shapes=[pltpu.VMEM((tn, tm), jnp.float32)],
        ),
        compiler_params=pltpu.CompilerParams(
            # K (reduction) axis innermost and "arbitrary"; B and the N/M tile
            # axes "parallel" so the grid shards across TensorCores on v7x.
            dimension_semantics=("parallel", "parallel", "parallel", "arbitrary"),
            # Safe on v7x (64 MiB physical), generous headroom on v5e/v6e.
            vmem_limit_bytes=48 * 1024 * 1024,
        ),
        cost_estimate=cost,
    )(x1_sq_p, x2_sq_p, x1p, x2p)

    out = out[:, :N, :M]
    return out[0] if squeeze else out


def _reference(x1, x2):
    diff = x1[:, :, None, :].astype(jnp.float32) - x2[:, None, :, :].astype(jnp.float32)
    return jnp.sqrt(jnp.maximum(jnp.sum(diff * diff, axis=-1), 0.0))


if __name__ == "__main__":
    key = jax.random.PRNGKey(0)
    k1, k2, k3, k4 = jax.random.split(key, 4)

    # Small, aligned-ish case (matches the module's generic usage).
    B, N, M, D = 2, 8, 16, 32
    x1 = jax.random.normal(k1, (B, N, D), dtype=jnp.float32)
    x2 = jax.random.normal(k2, (B, M, D), dtype=jnp.float32)
    dist = euclidean_distance_matrix(x1, x2)
    jax.block_until_ready(dist)
    ref = _reference(x1, x2)
    assert dist.shape == (B, N, M)
    assert jnp.allclose(dist, ref, atol=1e-3, rtol=1e-3)

    # Non-aligned shapes with small tile maxes to exercise N/M tiling, the
    # K-axis accumulator, and the padding/slicing path.
    B2_, N2_, M2_, D2_ = 2, 24, 160, 200
    y1 = jax.random.normal(k3, (B2_, N2_, D2_), dtype=jnp.float32)
    y2 = jax.random.normal(k4, (B2_, M2_, D2_), dtype=jnp.float32)
    dist2 = euclidean_distance_matrix(y1, y2, tn_max=16, tm_max=128, tk_max=128)
    jax.block_until_ready(dist2)
    ref2 = _reference(y1, y2)
    assert dist2.shape == (B2_, N2_, M2_)
    assert jnp.allclose(dist2, ref2, atol=1e-3, rtol=1e-3)

    print("KERNEL_OK")
</pallas_src>

<mosaic_0001>
module attributes {stable_mosaic.version = 11 : i64} {
  func.func @_cdist_kernel(%arg0: i32, %arg1: i32, %arg2: i32, %arg3: i32, %arg4: memref<1x8x1xf32, #tpu.memory_space<vmem>>, %arg5: memref<1x1x128xf32, #tpu.memory_space<vmem>>, %arg6: memref<1x8x128xf32, #tpu.memory_space<vmem>>, %arg7: memref<1x128x128xf32, #tpu.memory_space<vmem>>, %arg8: memref<1x8x128xf32, #tpu.memory_space<vmem>>, %arg9: memref<8x128xf32, #tpu.memory_space<vmem>>) attributes {dimension_semantics = [#tpu.dimension_semantics<parallel>, #tpu.dimension_semantics<parallel>, #tpu.dimension_semantics<parallel>, #tpu.dimension_semantics<arbitrary>], iteration_bounds = array<i64: 2, 1, 1, 1>, scalar_prefetch = 0 : i64, scratch_operands = 1 : i64, tpu.core_type = #tpu.core_type<tc>, window_params = [{transform_indices = @transform_0, window_bounds = array<i64: 1, 8, 1>}, {transform_indices = @transform_1, window_bounds = array<i64: 1, 1, 128>}, {transform_indices = @transform_2, window_bounds = array<i64: 1, 8, 128>}, {transform_indices = @transform_3, window_bounds = array<i64: 1, 128, 128>}, {transform_indices = @transform_4, window_bounds = array<i64: 1, 8, 128>}]} {
    %c0_i32 = arith.constant 0 : i32
    %0 = arith.cmpi eq, %arg3, %c0_i32 : i32
    %1 = arith.extui %0 : i1 to i32
    %c0_i32_0 = arith.constant 0 : i32
    %2 = arith.cmpi ne, %1, %c0_i32_0 : i32
    scf.if %2 {
      %cst_12 = arith.constant 0.000000e+00 : f32
      %14 = vector.broadcast %cst_12 : f32 to vector<8x128xf32>
      %c0_13 = arith.constant 0 : index
      %c0_14 = arith.constant 0 : index
      %15 = vector.load %arg9[%c0_13, %c0_14] : memref<8x128xf32, #tpu.memory_space<vmem>>, vector<8x128xf32>
      tpu.vector_store %arg9[%c0_13, %c0_14], %14 {strides = array<i32>} : memref<8x128xf32, #tpu.memory_space<vmem>>, vector<8x128xf32>,
    } else {
    }
    %c0 = arith.constant 0 : index
    %c0_1 = arith.constant 0 : index
    %3 = vector.load %arg9[%c0, %c0_1] : memref<8x128xf32, #tpu.memory_space<vmem>>, vector<8x128xf32>
    %c0_2 = arith.constant 0 : index
    %c0_3 = arith.constant 0 : index
    %c0_4 = arith.constant 0 : index
    %4 = vector.load %arg6[%c0_2, %c0_3, %c0_4] : memref<1x8x128xf32, #tpu.memory_space<vmem>>, vector<1x8x128xf32>
    %5 = vector.shape_cast %4 : vector<1x8x128xf32> to vector<8x128xf32>
    %c0_5 = arith.constant 0 : index
    %c0_6 = arith.constant 0 : index
    %c0_7 = arith.constant 0 : index
    %6 = vector.load %arg7[%c0_5, %c0_6, %c0_7] : memref<1x128x128xf32, #tpu.memory_space<vmem>>, vector<1x128x128xf32>
    %7 = vector.shape_cast %6 : vector<1x128x128xf32> to vector<128x128xf32>
    %cst = arith.constant dense<0.000000e+00> : vector<8x128xf32>
    %8 = tpu.matmul %5, %7, %cst {dimension_numbers = #tpu.dot_dimension_numbers<[1], [1], [0], [0], [0, 0, 1, 0], [], []>} : vector<8x128xf32>, vector<128x128xf32>, vector<8x128xf32> -> vector<8x128xf32>
    %9 = arith.addf %3, %8 : vector<8x128xf32>
    %c0_8 = arith.constant 0 : index
    %c0_9 = arith.constant 0 : index
    %10 = vector.load %arg9[%c0_8, %c0_9] : memref<8x128xf32, #tpu.memory_space<vmem>>, vector<8x128xf32>
    tpu.vector_store %arg9[%c0_8, %c0_9], %9 {strides = array<i32>} : memref<8x128xf32, #tpu.memory_space<vmem>>, vector<8x128xf32>,
    %c0_i32_10 = arith.constant 0 : i32
    %11 = arith.cmpi eq, %arg3, %c0_i32_10 : i32
    %12 = arith.extui %11 : i1 to i32
    %c0_i32_11 = arith.constant 0 : i32
    %13 = arith.cmpi ne, %12, %c0_i32_11 : i32
    scf.if %13 {
      %c0_12 = arith.constant 0 : index
      %c0_13 = arith.constant 0 : index
      %c0_14 = arith.constant 0 : index
      %14 = vector.load %arg4[%c0_12, %c0_13, %c0_14] : memref<1x8x1xf32, #tpu.memory_space<vmem>>, vector<1x8x1xf32>
      %15 = vector.shape_cast %14 : vector<1x8x1xf32> to vector<8x1xf32>
      %c0_15 = arith.constant 0 : index
      %c0_16 = arith.constant 0 : index
      %c0_17 = arith.constant 0 : index
      %16 = vector.load %arg5[%c0_15, %c0_16, %c0_17] : memref<1x1x128xf32, #tpu.memory_space<vmem>>, vector<1x1x128xf32>
      %17 = vector.shape_cast %16 : vector<1x1x128xf32> to vector<1x128xf32>
      %18 = vector.broadcast %15 : vector<8x1xf32> to vector<8x128xf32>
      %19 = vector.broadcast %17 : vector<1x128xf32> to vector<8x128xf32>
      %20 = arith.addf %18, %19 : vector<8x128xf32>
      %c0_18 = arith.constant 0 : index
      %c0_19 = arith.constant 0 : index
      %21 = vector.load %arg9[%c0_18, %c0_19] : memref<8x128xf32, #tpu.memory_space<vmem>>, vector<8x128xf32>
      %cst_20 = arith.constant 2.000000e+00 : f32
      %22 = vector.broadcast %cst_20 : f32 to vector<8x128xf32>
      %23 = arith.mulf %22, %21 : vector<8x128xf32>
      %24 = arith.subf %20, %23 : vector<8x128xf32>
      %cst_21 = arith.constant 0.000000e+00 : f32
      %25 = vector.broadcast %cst_21 : f32 to vector<8x128xf32>
      %26 = arith.maximumf %24, %25 : vector<8x128xf32>
      %27 = math.sqrt %26 : vector<8x128xf32>
      %c0_22 = arith.constant 0 : index
      %c0_23 = arith.constant 0 : index
      %c0_24 = arith.constant 0 : index
      %28 = vector.load %arg8[%c0_22, %c0_23, %c0_24] : memref<1x8x128xf32, #tpu.memory_space<vmem>>, vector<1x8x128xf32>
      %29 = vector.shape_cast %28 : vector<1x8x128xf32> to vector<8x128xf32>
      %30 = vector.shape_cast %27 : vector<8x128xf32> to vector<1x8x128xf32>
      tpu.vector_store %arg8[%c0_22, %c0_23, %c0_24], %30 {strides = array<i32>} : memref<1x8x128xf32, #tpu.memory_space<vmem>>, vector<1x8x128xf32>,
    } else {
    }
    return
  }
  func.func @transform_0(%arg0: i32, %arg1: i32, %arg2: i32, %arg3: i32) -> (i32, i32, i32) {
    %c0_i32 = arith.constant 0 : i32
    %c0_i32_0 = arith.constant 0 : i32
    return %arg0, %arg1, %c0_i32 : i32, i32, i32
  }
  func.func @transform_1(%arg0: i32, %arg1: i32, %arg2: i32, %arg3: i32) -> (i32, i32, i32) {
    %c0_i32 = arith.constant 0 : i32
    %c0_i32_0 = arith.constant 0 : i32
    return %arg0, %c0_i32, %arg2 : i32, i32, i32
  }
  func.func @transform_2(%arg0: i32, %arg1: i32, %arg2: i32, %arg3: i32) -> (i32, i32, i32) {
    %c0_i32 = arith.constant 0 : i32
    return %arg0, %arg1, %arg3 : i32, i32, i32
  }
  func.func @transform_3(%arg0: i32, %arg1: i32, %arg2: i32, %arg3: i32) -> (i32, i32, i32) {
    %c0_i32 = arith.constant 0 : i32
    return %arg0, %arg2, %arg3 : i32, i32, i32
  }
  func.func @transform_4(%arg0: i32, %arg1: i32, %arg2: i32, %arg3: i32) -> (i32, i32, i32) {
    %c0_i32 = arith.constant 0 : i32
    return %arg0, %arg1, %arg2 : i32, i32, i32
  }
}

</mosaic_0001>

<llo_original>
// kernel: tpu_custom_call.1
$region0: #{tpu_custom_call.1}
  #allocation0 [shape = 'u32[]', space=smem, size = 0x4, offset = 0x4, fixed_abs, tag = 'smem constant byte address 0x4 - core index']
  #allocation1 [shape = 'u32[72,128]{1,0:T(1,128)}', space=vmem, size = 0x9000, scoped, tag = 'internal scratch']
  #allocation2 [shape = 'f32[8,128]{1,0:T(8,128)}', space=vmem, size = 0x1000, scoped, tag = 'scratch operand']
  %s0 = inlined_call_operand.vmem [shape: f32[2,8,1], index: 0, kind: input, shape index: {}]
  %s1 = inlined_call_operand.vmem [shape: f32[2,1,128], index: 1, kind: input, shape index: {}]
  %s2 = inlined_call_operand.vmem [shape: f32[2,8,128], index: 2, kind: input, shape index: {}]
  %s3 = inlined_call_operand.hbm [shape: f32[2,128,128], index: 3, kind: input, shape index: {}]
  %s4 = inlined_call_operand.hbm [shape: f32[2,8,128], index: 4, kind: output, shape index: {}]
  %s5 = sld [smem:[#allocation0]]
  $region61: #{tpu_custom_call.1} parent=0
    _
  %s7 = ssub.s32 1, %s5
  %s8 = scalar_select 0, %s7, %s5
  $region1: #{tpu_custom_call.1} parent=0
    #allocation3 [shape = 'u8[131072]{0}', space=vmem, size = 0x20000, scoped, tag = 'input window, operand 3']
    #allocation4 [shape = 's32[2]{0}', space=sflag, size = 0x8, scoped, tag = 'scoped memory for tpu_custom_call.1']
    #allocation5 [shape = 's32[2]{0}', space=sflag, size = 0x8, scoped, tag = 'scoped memory for tpu_custom_call.1']
    #allocation6 [shape = 'u8[8192]{0}', space=vmem, size = 0x2000, scoped, tag = 'output window, operand 0']
    %9 = vsyncpa [#allocation4], 0
    %s10 = scalar_lea.sflag [#allocation4], 1
    %11 = vsyncpa %s10, 0
    %12 = vsyncpa [#allocation5], 0
    %s13 = scalar_lea.sflag [#allocation5], 1
    %14 = vsyncpa %s13, 0
    loop: start=0, step=1, limit=4
    $region2: #{tpu_custom_call.1} parent=1 // loop_pre_header
      _
    $region3: #{tpu_custom_call.1} parent=1 // loop_header
      %s16 = sphi 0, %s20
      %p17 = scmp.ge.s32.totalorder %s16, 4
      %s23 = sphi 0, %s49
      %s24 = sphi 0, %s45
      %s25 = sphi 0, %s41
      %s26 = sphi 0, %s37
      %s27 = sphi 0, %s23
      %s28 = sphi 0, %s24
      %s29 = sphi 0, %s25
      %s30 = sphi 0, %s26
      %s31 = sphi 0, %s27
      %s32 = sphi 0, %s28
      %s33 = sphi 0, %s29
      %s34 = sphi 0, %s30
      %s54 = sphi 0, %s56
      %s57 = sphi 0, %s54
      %s58 = sphi 0, %s57
      %s74 = sphi 0, %s58
      %s82 = sphi 0, %s84
      %s85 = sphi 0, %s82
      %s86 = sphi 0, %s85
      %s102 = sphi 0, %s86
      %s112 = sphi 0, %s114
      %s115 = sphi 0, %s112
      %s116 = sphi 0, %s115
      %s132 = sphi 0, %s116
      %s142 = sphi 0, %s144
      %s145 = sphi 0, %s142
      %s146 = sphi 0, %s145
      %s162 = sphi 0, %s146
      %s172 = sphi 0, %s174
      %s175 = sphi 0, %s172
      %s176 = sphi 0, %s175
      %s192 = sphi 0, %s176
    $region4: #{tpu_custom_call.1} parent=1 // loop_header_branch
      %19 = sbr.rel (%p17) target = $region8
    $region5: #{tpu_custom_call.1} parent=1 // loop_body
      %s21 = ssub.s32 %s16, 1
      %s22 = ssub.s32 %s16, 2
      %s35 = sadd.s32 1, %s26
      %p36 = scmp.ge.s32.totalorder %s35, 1
      %s37 = scalar_select %p36, 0, %s35
      %s38 = sadd.s32 1, %s25
      %s39 = scalar_select %p36, %s38, %s25
      %p40 = scmp.ge.s32.totalorder %s39, 1
      %s41 = scalar_select %p40, 0, %s39
      %s42 = sadd.s32 1, %s24
      %s43 = scalar_select %p40, %s42, %s24
      %p44 = scmp.ge.s32.totalorder %s43, 1
      %s45 = scalar_select %p44, 0, %s43
      %s46 = sadd.s32 1, %s23
      %s47 = scalar_select %p44, %s46, %s23
      %p48 = scmp.ge.s32.totalorder %s47, 2
      %s49 = scalar_select %p48, 0, %s47
      %s50 = ssub.s32 %s23, %s49
      %s51 = ssub.s32 %s24, %s45
      %s52 = sor.u32 %s50, %s51
      %p53 = scmp.eq.s32.totalorder %s52, 0
      %s55 = sadd.s32 %s54, 1
      %s56 = scalar_select %p53, %s54, %s55
      %p59 = pneg %p53
      %p60 = scmp.eq.s32.totalorder %s16, 1
      %p61 = por %p59, %p60
      %p62 = scmp.ne.s32.totalorder %s54, %s57
      %p63 = scmp.eq.s32.totalorder %s16, 0
      %p64 = por %p62, %p63
      %p65 = scmp.ne.s32.totalorder %s54, %s57
      %p66 = scmp.eq.s32.totalorder %s21, 1
      %p67 = por %p65, %p66
      %p68 = scmp.ne.s32.totalorder %s57, %s58
      %p69 = scmp.eq.s32.totalorder %s21, 0
      %p70 = por %p68, %p69
      %p71 = scmp.ne.s32.totalorder %s57, %s58
      %p72 = scmp.eq.s32.totalorder %s22, 1
      %p73 = por %p71, %p72
      %p75 = scmp.ne.s32.totalorder %s58, %s74
      %p76 = scmp.eq.s32.totalorder %s22, 0
      %p77 = por %p75, %p76
      %s78 = ssub.s32 %s23, %s49
      %s79 = ssub.s32 %s25, %s41
      %s80 = sor.u32 %s78, %s79
      %p81 = scmp.eq.s32.totalorder %s80, 0
      %s83 = sadd.s32 %s82, 1
      %s84 = scalar_select %p81, %s82, %s83
      %p87 = pneg %p81
      %p88 = scmp.eq.s32.totalorder %s16, 1
      %p89 = por %p87, %p88
      %p90 = scmp.ne.s32.totalorder %s82, %s85
      %p91 = scmp.eq.s32.totalorder %s16, 0
      %p92 = por %p90, %p91
      %p93 = scmp.ne.s32.totalorder %s82, %s85
      %p94 = scmp.eq.s32.totalorder %s21, 1
      %p95 = por %p93, %p94
      %p96 = scmp.ne.s32.totalorder %s85, %s86
      %p97 = scmp.eq.s32.totalorder %s21, 0
      %p98 = por %p96, %p97
      %p99 = scmp.ne.s32.totalorder %s85, %s86
      %p100 = scmp.eq.s32.totalorder %s22, 1
      %p101 = por %p99, %p100
      %p103 = scmp.ne.s32.totalorder %s86, %s102
      %p104 = scmp.eq.s32.totalorder %s22, 0
      %p105 = por %p103, %p104
      %s106 = ssub.s32 %s23, %s49
      %s107 = ssub.s32 %s24, %s45
      %s108 = sor.u32 %s106, %s107
      %s109 = ssub.s32 %s26, %s37
      %s110 = sor.u32 %s108, %s109
      %p111 = scmp.eq.s32.totalorder %s110, 0
      %s113 = sadd.s32 %s112, 1
      %s114 = scalar_select %p111, %s112, %s113
      %p117 = pneg %p111
      %p118 = scmp.eq.s32.totalorder %s16, 1
      %p119 = por %p117, %p118
      %p120 = scmp.ne.s32.totalorder %s112, %s115
      %p121 = scmp.eq.s32.totalorder %s16, 0
      %p122 = por %p120, %p121
      %p123 = scmp.ne.s32.totalorder %s112, %s115
      %p124 = scmp.eq.s32.totalorder %s21, 1
      %p125 = por %p123, %p124
      %p126 = scmp.ne.s32.totalorder %s115, %s116
      %p127 = scmp.eq.s32.totalorder %s21, 0
      %p128 = por %p126, %p127
      %p129 = scmp.ne.s32.totalorder %s115, %s116
      %p130 = scmp.eq.s32.totalorder %s22, 1
      %p131 = por %p129, %p130
      %p133 = scmp.ne.s32.totalorder %s116, %s132
      %p134 = scmp.eq.s32.totalorder %s22, 0
      %p135 = por %p133, %p134
      %s136 = ssub.s32 %s23, %s49
      %s137 = ssub.s32 %s25, %s41
      %s138 = sor.u32 %s136, %s137
      %s139 = ssub.s32 %s26, %s37
      %s140 = sor.u32 %s138, %s139
      %p141 = scmp.eq.s32.totalorder %s140, 0
      %s143 = sadd.s32 %s142, 1
      %s144 = scalar_select %p141, %s142, %s143
      %p147 = pneg %p141
      %p148 = scmp.eq.s32.totalorder %s16, 1
      %p149 = por %p147, %p148
      %p150 = scmp.ne.s32.totalorder %s142, %s145
      %p151 = scmp.eq.s32.totalorder %s16, 0
      %p152 = por %p150, %p151
      %p153 = scmp.ne.s32.totalorder %s142, %s145
      %p154 = scmp.eq.s32.totalorder %s21, 1
      %p155 = por %p153, %p154
      %p156 = scmp.ne.s32.totalorder %s145, %s146
      %p157 = scmp.eq.s32.totalorder %s21, 0
      %p158 = por %p156, %p157
      %p159 = scmp.ne.s32.totalorder %s145, %s146
      %p160 = scmp.eq.s32.totalorder %s22, 1
      %p161 = por %p159, %p160
      %p163 = scmp.ne.s32.totalorder %s146, %s162
      %p164 = scmp.eq.s32.totalorder %s22, 0
      %p165 = por %p163, %p164
      %s166 = ssub.s32 %s23, %s49
      %s167 = ssub.s32 %s24, %s45
      %s168 = sor.u32 %s166, %s167
      %s169 = ssub.s32 %s25, %s41
      %s170 = sor.u32 %s168, %s169
      %p171 = scmp.eq.s32.totalorder %s170, 0
      %s173 = sadd.s32 %s172, 1
      %s174 = scalar_select %p171, %s172, %s173
      %p177 = pneg %p171
      %p178 = scmp.eq.s32.totalorder %s16, 1
      %p179 = por %p177, %p178
      %p180 = scmp.ne.s32.totalorder %s172, %s175
      %p181 = scmp.eq.s32.totalorder %s16, 0
      %p182 = por %p180, %p181
      %p183 = scmp.ne.s32.totalorder %s172, %s175
      %p184 = scmp.eq.s32.totalorder %s21, 1
      %p185 = por %p183, %p184
      %p186 = scmp.ne.s32.totalorder %s175, %s176
      %p187 = scmp.eq.s32.totalorder %s21, 0
      %p188 = por %p186, %p187
      %p189 = scmp.ne.s32.totalorder %s175, %s176
      %p190 = scmp.eq.s32.totalorder %s22, 1
      %p191 = por %p189, %p190
      %p193 = scmp.ne.s32.totalorder %s176, %s192
      %p194 = scmp.eq.s32.totalorder %s22, 0
      %p195 = por %p193, %p194
      %p196 = scmp.le.s32.totalorder 1, %s16
      %p197 = scmp.lt.s32.totalorder %s16, 3
      %p198 = pnand %p196, %p197
      %p199 = pneg %p198
      // Predicated region
      $region9: #{tpu_custom_call.1} parent=5 // pred_check
        _
      $region10: #{tpu_custom_call.1} parent=5 // pred_check_branch
        %201 = sbr.rel (%p198) target = $region12
      $region11: #{tpu_custom_call.1} parent=5 // pred_region
        %s202 = ssub.s32 %s16, 1
      $region12: #{tpu_custom_call.1} parent=5 // pred_fallthru
        _
      %p203 = scmp.lt.s32.totalorder %s16, 2
      // Predicated region
      $region13: #{tpu_custom_call.1} parent=5 // pred_check
        %p204 = pneg %p203
      $region14: #{tpu_custom_call.1} parent=5 // pred_check_branch
        %206 = sbr.rel (%p204) target = $region16
      $region15: #{tpu_custom_call.1} parent=5 // pred_region
        // Predicated region
        $region17: #{tpu_custom_call.1} parent=15 // pred_check
          %p207 = pneg %p64
        $region18: #{tpu_custom_call.1} parent=15 // pred_check_branch
          %209 = sbr.rel (%p207) target = $region20
        $region19: #{tpu_custom_call.1} parent=15 // pred_region
          %p210 = scmp.lt.s32.totalorder %s23, 1
          %s211 = scalar_select %p210, %s23, 1
          %p212 = scmp.lt.s32.totalorder %s24, 0
          %s213 = scalar_select %p212, %s24, 0
          %s214 = sadd.s32 %s213, %s211
          %s215 = smul.addr %s214, 8
          %s216 = scalar_lea.vmem %s0, %s215
        $region20: #{tpu_custom_call.1} parent=15 // pred_fallthru
          _
        // Predicated region
        $region21: #{tpu_custom_call.1} parent=15 // pred_check
          %p217 = pneg %p92
        $region22: #{tpu_custom_call.1} parent=15 // pred_check_branch
          %219 = sbr.rel (%p217) target = $region24
        $region23: #{tpu_custom_call.1} parent=15 // pred_region
          %p220 = scmp.lt.s32.totalorder %s23, 1
          %s221 = scalar_select %p220, %s23, 1
          %p222 = scmp.lt.s32.totalorder %s25, 0
          %s223 = scalar_select %p222, %s25, 0
          %s224 = sadd.s32 %s223, %s221
          %s225 = scalar_lea.vmem %s1, %s224
        $region24: #{tpu_custom_call.1} parent=15 // pred_fallthru
          _
        // Predicated region
        $region25: #{tpu_custom_call.1} parent=15 // pred_check
          %p226 = pneg %p122
        $region26: #{tpu_custom_call.1} parent=15 // pred_check_branch
          %228 = sbr.rel (%p226) target = $region28
        $region27: #{tpu_custom_call.1} parent=15 // pred_region
          %p229 = scmp.lt.s32.totalorder %s23, 1
          %s230 = scalar_select %p229, %s23, 1
          %p231 = scmp.lt.s32.totalorder %s24, 0
          %s232 = scalar_select %p231, %s24, 0
          %p233 = scmp.lt.s32.totalorder %s26, 0
          %s234 = scalar_select %p233, %s26, 0
          %s235 = sadd.s32 %s234, %s232
          %s236 = sadd.s32 %s235, %s230
          %s237 = smul.addr %s236, 8
          %s238 = scalar_lea.vmem %s2, %s237
        $region28: #{tpu_custom_call.1} parent=15 // pred_fallthru
          _
        // Predicated region
        $region29: #{tpu_custom_call.1} parent=15 // pred_check
          %p239 = pneg %p152
        $region30: #{tpu_custom_call.1} parent=15 // pred_check_branch
          %241 = sbr.rel (%p239) target = $region32
        $region31: #{tpu_custom_call.1} parent=15 // pred_region
          %s242 = sand.u32 %s142, 1
          %s243 = scalar_lea.sflag [#allocation4], %s242
          %s244 = sand.u32 %s142, 1
          %s245 = smul.addr %s244, 128
          %s246 = scalar_lea.vmem [#allocation3], %s245
          %s247 = smul.u32 16, %s25
          %249 = vsyncadd %s243, 0
          %s250 = sadd.s32 %s26, %s247
          %s251 = smul.addr %s23, 16
          %s252 = sadd.s32 %s250, %s251
          %s253 = smul.addr %s252, 8
          %s254 = scalar_lea.hbm %s3, %s253
          %s255 = sshll.u32 %s254, 4
          %s256 = int_to_ptr.hbm [resolvable:$true] %s255
          %s257 = sshll.u32 %s246, 4
          %s258 = int_to_ptr.vmem [resolvable:$true] %s257
          %263 = dma.hbm_to_vmem [thread:$0]  %s256, 2048, %s258, %s243, 128, 128, 8
        $region32: #{tpu_custom_call.1} parent=15 // pred_fallthru
          _
      $region16: #{tpu_custom_call.1} parent=5 // pred_fallthru
        _
      %p264 = scmp.le.s32.totalorder 1, %s16
      %p265 = scmp.lt.s32.totalorder %s16, 3
      %p266 = pnand %p264, %p265
      %p267 = pneg %p266
      // Predicated region
      $region33: #{tpu_custom_call.1} parent=5 // pred_check
        _
      $region34: #{tpu_custom_call.1} parent=5 // pred_check_branch
        %269 = sbr.rel (%p266) target = $region36
      $region35: #{tpu_custom_call.1} parent=5 // pred_region
        %s270 = ssub.s32 %s16, 1
        %s271 = sand.u32 %s145, 1
        %s272 = scalar_lea.sflag [#allocation4], %s271
        %s273 = sand.u32 %s145, 1
        %s274 = smul.addr %s273, 128
        %s275 = scalar_lea.vmem [#allocation3], %s274
        // Predicated region
        $region37: #{tpu_custom_call.1} parent=35 // pred_check
          %p276 = pneg %p158
        $region38: #{tpu_custom_call.1} parent=35 // pred_check_branch
          %278 = sbr.rel (%p276) target = $region40
        $region39: #{tpu_custom_call.1} parent=35 // pred_region
          %280 = dma.done %s272, 2048
        $region40: #{tpu_custom_call.1} parent=35 // pred_fallthru
          _
        %p281 = scmp.lt.s32.totalorder %s27, 1
        %s282 = scalar_select %p281, %s27, 1
        %p283 = scmp.lt.s32.totalorder %s28, 0
        %s284 = scalar_select %p283, %s28, 0
        %s285 = sadd.s32 %s284, %s282
        %s286 = smul.addr %s285, 8
        %s287 = scalar_lea.vmem %s0, %s286
        %p288 = pneg %p70
        %p289 = pneg %p67
        %p290 = scmp.lt.s32.totalorder %s27, 1
        %s291 = scalar_select %p290, %s27, 1
        %p292 = scmp.lt.s32.totalorder %s29, 0
        %s293 = scalar_select %p292, %s29, 0
        %s294 = sadd.s32 %s293, %s291
        %s295 = scalar_lea.vmem %s1, %s294
        %p296 = pneg %p98
        %p297 = pneg %p95
        %p298 = scmp.lt.s32.totalorder %s27, 1
        %s299 = scalar_select %p298, %s27, 1
        %p300 = scmp.lt.s32.totalorder %s28, 0
        %s301 = scalar_select %p300, %s28, 0
        %p302 = scmp.lt.s32.totalorder %s30, 0
        %s303 = scalar_select %p302, %s30, 0
        %s304 = sadd.s32 %s303, %s301
        %s305 = sadd.s32 %s304, %s299
        %s306 = smul.addr %s305, 8
        %s307 = scalar_lea.vmem %s2, %s306
        %p308 = pneg %p128
        %p309 = pneg %p125
        %s310 = sand.u32 %s145, 1
        %s311 = scalar_lea.sflag [#allocation4], %s310
        %s312 = sand.u32 %s145, 1
        %s313 = smul.addr %s312, 128
        %s314 = scalar_lea.vmem [#allocation3], %s313
        %p315 = pneg %p158
        %p316 = pneg %p155
        %p317 = pneg %p188
        %p318 = pneg %p185
        %s319 = sand.u32 %s175, 1
        %s320 = scalar_lea.sflag [#allocation5], %s319
        %s321 = sand.u32 %s175, 1
        %s322 = smul.addr %s321, 8
        %s323 = scalar_lea.vmem [#allocation6], %s322
        %p324 = scmp.lt.s32.totalorder %s27, 1
        %s325 = scalar_select %p324, %s27, 1
        %p326 = scmp.lt.s32.totalorder %s28, 0
        %s327 = scalar_select %p326, %s28, 0
        %s328 = sadd.s32 %s327, %s325
        %s329 = smul.addr %s328, 8
        %s330 = scalar_lea.vmem %s0, %s329
        %p331 = scmp.lt.s32.totalorder %s27, 1
        %s332 = scalar_select %p331, %s27, 1
        %p333 = scmp.lt.s32.totalorder %s29, 0
        %s334 = scalar_select %p333, %s29, 0
        %s335 = sadd.s32 %s334, %s332
        %s336 = scalar_lea.vmem %s1, %s335
        %p337 = scmp.lt.s32.totalorder %s27, 1
        %s338 = scalar_select %p337, %s27, 1
        %p339 = scmp.lt.s32.totalorder %s28, 0
        %s340 = scalar_select %p339, %s28, 0
        %p341 = scmp.lt.s32.totalorder %s30, 0
        %s342 = scalar_select %p341, %s30, 0
        %s343 = sadd.s32 %s342, %s340
        %s344 = sadd.s32 %s343, %s338
        %s345 = smul.addr %s344, 8
        %s346 = scalar_lea.vmem %s2, %s345
        %s347 = smul.u32 16, %s29
        %p348 = scmp.eq.s32.totalorder %s30, 0
        // Predicated region
        $region41: #{tpu_custom_call.1} parent=35 // pred_check
          %p349 = pneg %p348
        $region42: #{tpu_custom_call.1} parent=35 // pred_check_branch
          %351 = sbr.rel (%p349) target = $region44
        $region43: #{tpu_custom_call.1} parent=35 // pred_region
          %352 = vst [vmem:[#allocation2] sm:$0xff] 0.0
        $region44: #{tpu_custom_call.1} parent=35 // pred_fallthru
          _
        %v353 = vld [vmem:[#allocation2] sm:$0xff]
        %v354 = vld [vmem:[%s346] sm:$0xff]
        %v355 = vld [vmem:[%s275] sm:$0xff]
        %v356 = vld [vmem:[%s275 + $0x8] sm:$0xff]
        %v357 = vld [vmem:[%s275 + $0x10] sm:$0xff]
        %v358 = vld [vmem:[%s275 + $0x18] sm:$0xff]
        %v359 = vld [vmem:[%s275 + $0x20] sm:$0xff]
        %v360 = vld [vmem:[%s275 + $0x28] sm:$0xff]
        %v361 = vld [vmem:[%s275 + $0x30] sm:$0xff]
        %v362 = vld [vmem:[%s275 + $0x38] sm:$0xff]
        %v363 = vld [vmem:[%s275 + $0x40] sm:$0xff]
        %v364 = vld [vmem:[%s275 + $0x48] sm:$0xff]
        %v365 = vld [vmem:[%s275 + $0x50] sm:$0xff]
        %v366 = vld [vmem:[%s275 + $0x58] sm:$0xff]
        %v367 = vld [vmem:[%s275 + $0x60] sm:$0xff]
        %v368 = vld [vmem:[%s275 + $0x68] sm:$0xff]
        %v369 = vld [vmem:[%s275 + $0x70] sm:$0xff]
        %v370 = vld [vmem:[%s275 + $0x78] sm:$0xff]
        %371 = vmatpush.xpose.msra.mxu0 %v370
        %372 = vmatpush.xpose.msra.mxu0 %v369
        %373 = vmatpush.xpose.msra.mxu0 %v368
        %374 = vmatpush.xpose.msra.mxu0 %v367
        %375 = vmatpush.xpose.msra.mxu0 %v366
        %376 = vmatpush.xpose.msra.mxu0 %v365
        %377 = vmatpush.xpose.msra.mxu0 %v364
        %378 = vmatpush.xpose.msra.mxu0 %v363
        %379 = vmatpush.xpose.msra.mxu0 %v362
        %380 = vmatpush.xpose.msra.mxu0 %v361
        %381 = vmatpush.xpose.msra.mxu0 %v360
        %382 = vmatpush.xpose.msra.mxu0 %v359
        %383 = vmatpush.xpose.msra.mxu0 %v358
        %384 = vmatpush.xpose.msra.mxu0 %v357
        %385 = vmatpush.xpose.msra.mxu0 %v356
        %386 = vmatpush.xpose.msra.mxu0 %v355
        %387 = vmatmul.f32.gmra.mxu0 %v354
        %v388 = vpop.f32.mrf.mxu0
        %v389 = vadd.f32 0.0, %v388
        %390 = vdwg.mxu0
        %v391 = vadd.f32 %v353, %v389
        %392 = vst [vmem:[#allocation2] sm:$0xff] %v391
        // Predicated region
        $region45: #{tpu_custom_call.1} parent=35 // pred_check
          %p393 = pneg %p348
        $region46: #{tpu_custom_call.1} parent=35 // pred_check_branch
          %395 = sbr.rel (%p393) target = $region48
        $region47: #{tpu_custom_call.1} parent=35 // pred_region
          %v396 = vld [vmem:[%s330] sm:$0xff]
          %v397 = vld [vmem:[%s336] sm:$0x1]
          %399 = vset.pattern.permute.xlu0 0
          %400 = vperm.xlu0 %399, %v396
          %v401 = vpop.permute.xlu0 %400
          %v404 = vperm.slane %v397, 0
          %v406 = vadd.f32 %v401, %v404
          %v407 = vld [vmem:[#allocation2] sm:$0xff]
          %v408 = vmul.f32 %v407, 2.0
          %v409 = vsub.f32 %v406, %v408
          %v410 = vmax.f32 %v409, 0.0
          %v411 = vrsqrt.pop %v410
          %v412 = vmul.f32 %v411, %v410
          %v413 = vmul.f32 %v412, %v411
          %v414 = vmul.f32 0.5, %v413
          %v415 = vsub.f32 1.5, %v414
          %v416 = vmul.f32 %v411, %v415
          %v417 = vmul.f32 %v410, %v416
          %vm418 = vcmp.eq.f32.partialorder %v410, inf
          %v419 = vsel %vm418, %v410, %v417
          %vm420 = vcmp.eq.f32.partialorder %v410, 0.0
          %v421 = vand.u32 %v410, 2147483648
          %v422 = vsel %vm420, %v421, %v419
          %423 = vst [vmem:[%s323] sm:$0xff] %v422
        $region48: #{tpu_custom_call.1} parent=35 // pred_fallthru
          _
        %s424 = sand.u32 %s175, 1
        %s425 = scalar_lea.sflag [#allocation5], %s424
        %s426 = sand.u32 %s175, 1
        %s427 = smul.addr %s426, 8
        %s428 = scalar_lea.vmem [#allocation6], %s427
        // Predicated region
        $region49: #{tpu_custom_call.1} parent=35 // pred_check
          %p429 = pneg %p185
        $region50: #{tpu_custom_call.1} parent=35 // pred_check_branch
          %431 = sbr.rel (%p429) target = $region52
        $region51: #{tpu_custom_call.1} parent=35 // pred_region
          %433 = vsyncadd %s425, 0
          %s434 = sadd.s32 %s29, %s28
          %s435 = sadd.s32 %s434, %s27
          %s436 = smul.addr %s435, 8
          %s437 = scalar_lea.hbm %s4, %s436
          %s439 = sshll.u32 %s428, 4
          %s440 = int_to_ptr.vmem [resolvable:$true] %s439
          %s441 = sshll.u32 %s437, 4
          %s442 = int_to_ptr.hbm [resolvable:$true] %s441
          %444 = dma.vmem_to_hbm [thread:$0]  %s440, 128, %s442, %s425
        $region52: #{tpu_custom_call.1} parent=35 // pred_fallthru
          _
      $region36: #{tpu_custom_call.1} parent=5 // pred_fallthru
        _
      %p445 = scmp.le.s32.totalorder 2, %s16
      // Predicated region
      $region53: #{tpu_custom_call.1} parent=5 // pred_check
        %p446 = pneg %p445
      $region54: #{tpu_custom_call.1} parent=5 // pred_check_branch
        %448 = sbr.rel (%p446) target = $region56
      $region55: #{tpu_custom_call.1} parent=5 // pred_region
        %s449 = ssub.s32 %s16, 2
        // Predicated region
        $region57: #{tpu_custom_call.1} parent=55 // pred_check
          %p450 = pneg %p191
        $region58: #{tpu_custom_call.1} parent=55 // pred_check_branch
          %452 = sbr.rel (%p450) target = $region60
        $region59: #{tpu_custom_call.1} parent=55 // pred_region
          %s453 = sand.u32 %s176, 1
          %s454 = scalar_lea.sflag [#allocation5], %s453
          %s455 = sand.u32 %s176, 1
          %s456 = smul.addr %s455, 8
          %s457 = scalar_lea.vmem [#allocation6], %s456
          %459 = dma.done %s454, 128
        $region60: #{tpu_custom_call.1} parent=55 // pred_fallthru
          _
      $region56: #{tpu_custom_call.1} parent=5 // pred_fallthru
        _
    $region6: #{tpu_custom_call.1} parent=1 // loop_footer
      %s20 = sadd.s32 1, %s16
    $region7: #{tpu_custom_call.1} parent=1 // loop_footer_branch
      %15 = sbr.rel target = $region3
    $region8: #{tpu_custom_call.1} parent=1 // loop_exit
      _
    %460 = vsyncpa [#allocation4], 1
    %s461 = scalar_lea.sflag [#allocation4], 1
    %462 = vsyncpa %s461, 1
    %463 = vsyncpa [#allocation5], 1
    %s464 = scalar_lea.sflag [#allocation5], 1
    %465 = vsyncpa %s464, 1

</llo_original>
